<compile_context>
chip_gen: v7x
topology: tpu7x:2x2x1
jax: 0.10.0
libtpu: 0.0.40
codegen_flags: <defaults>
</compile_context>

<pallas_src>
import jax
import jax.numpy as jnp
from jax.experimental import pallas as pl
from jax.experimental.pallas import tpu as pltpu

C_IN, C_OUT = 4, 8
H = W = 16
HW = H * W
NUM_CLASSES = 10
K = 3                      # conv kernel size, padding=1
KKC = K * K * C_IN         # 36
KKC1 = KKC + 1             # 37: + ones row carrying the conv bias
TB_MAX = 128               # images per grid step (keeps lane dims 128-multiples)


def gradcam_fwd_kernel(xc_ref, wc_ref, wf_ref, bf_ref, out_ref):
    tb = out_ref.shape[-1]                      # images in this batch tile
    # features: Conv2d(3x3, pad=1) + bias for the whole tile as ONE lane-dense
    # MXU contraction (bias fused via the trailing ones row of xc):
    #   (C_OUT, 37) @ (37, tb*HW) -> (C_OUT, tb*HW), f32 accumulation.
    feat = jnp.dot(wc_ref[...], xc_ref[...], preferred_element_type=jnp.float32)
    feat = jnp.maximum(feat, 0.0)               # ReLU (VPU)

    # AdaptiveAvgPool2d((1,1)) per image: aligned 256-lane slice + cross-lane
    # sum (XLU) per image, scattered to its lane of the pooled tile with a
    # select (VPU).  Avoids an in-kernel lane-split reshape of the feature slab.
    lane = jax.lax.broadcasted_iota(jnp.int32, (C_OUT, tb), 1)   # hoisted once
    pooled = jnp.zeros((C_OUT, tb), jnp.float32)
    for b in range(tb):
        s_b = jnp.sum(feat[:, b * HW:(b + 1) * HW], axis=-1, keepdims=True)
        pooled = pooled + jnp.where(lane == b, s_b, 0.0)
    pooled = pooled * (1.0 / HW)                # (C_OUT, tb)

    # classifier: one (NUM_CLASSES, C_OUT) @ (C_OUT, tb) matmul; logits come out
    # lane-dense over the batch tile.
    out_ref[...] = (jnp.dot(wf_ref[...], pooled, preferred_element_type=jnp.float32)
                    + bf_ref[...])


def prepare_params(conv_w, conv_b, fc_w, fc_b):
    """One-time weight-layout glue (hoisted out of the per-call path).

    conv_w: PyTorch OIHW (C_OUT, C_IN, K, K) -> (C_OUT, 36) with row ordering
            (ky*K + kx)*C_IN + c, matching the im2col row ordering; the conv
            bias is appended as a 37th column (fused via the ones row of xc).
    """
    wc = conv_w.transpose(0, 2, 3, 1).reshape(C_OUT, KKC)          # (8, 36)
    wc = jnp.concatenate([wc, conv_b[:, None]], axis=1)            # (8, 37)
    wc = wc.astype(jnp.bfloat16)
    wf = fc_w.astype(jnp.float32)                                  # (10, 8)
    bf = fc_b.reshape(NUM_CLASSES, 1).astype(jnp.float32)          # (10, 1)
    return wc, wf, bf


def _im2col_lanes(x_nchw):
    """(B, C_IN, H, W) f32 -> bf16 im2col (37, B*HW), batch folded into lanes.

    Column ordering: col = b*HW + y*W + x (image-major).  Row ordering:
    (ky*K + kx)*C_IN + c, plus a trailing all-ones row (carries the conv bias).
    """
    b = x_nchw.shape[0]
    xp = jnp.pad(x_nchw, ((0, 0), (0, 0), (1, 1), (1, 1)))
    taps = [xp[:, :, ky:ky + H, kx:kx + W] for ky in range(K) for kx in range(K)]
    xc = jnp.stack(taps, axis=1).reshape(b, KKC, HW)               # (B, 36, 256)
    xc = jnp.concatenate([xc, jnp.ones((b, 1, HW), xc.dtype)], axis=1)  # (B, 37, 256)
    xc = xc.transpose(1, 0, 2).reshape(KKC1, b * HW)               # (37, B*HW)
    return xc.astype(jnp.bfloat16)


@jax.jit
def gradcam_forward(x_nchw, wc, wf, bf):
    """x_nchw: (B, C_IN, H, W) f32. Returns logits (B, NUM_CLASSES) f32.

    For B == 1 this is exactly GradCAM.forward; larger batches run the same
    per-image forward, TB images per (parallel) grid step.
    """
    b, cin, h, w = x_nchw.shape
    assert cin == C_IN and h == H and w == W

    tb = b if b <= TB_MAX else TB_MAX           # batch-tile size
    b_pad = pl.cdiv(b, tb) * tb
    if b_pad != b:
        x_nchw = jnp.pad(x_nchw, ((0, b_pad - b), (0, 0), (0, 0), (0, 0)))

    xc = _im2col_lanes(x_nchw)                  # (37, b_pad*HW) bf16, fused in jit
    grid = (b_pad // tb,)

    out = pl.pallas_call(
        gradcam_fwd_kernel,
        out_shape=jax.ShapeDtypeStruct((NUM_CLASSES, b_pad), jnp.float32),
        grid=grid,
        in_specs=[
            # per-tile im2col slab: lanes = tb*HW (full dim or a 128-multiple)
            pl.BlockSpec((KKC1, tb * HW), lambda i: (0, i)),
            # weights/bias: VMEM-resident for the whole grid (no re-DMA)
            pl.BlockSpec(memory_space=pltpu.MemorySpace.VMEM),
            pl.BlockSpec(memory_space=pltpu.MemorySpace.VMEM),
            pl.BlockSpec(memory_space=pltpu.MemorySpace.VMEM),
        ],
        # lane-dense logits block: (NUM_CLASSES, tb), batch on the lane axis
        out_specs=pl.BlockSpec((NUM_CLASSES, tb), lambda i: (0, i)),
        compiler_params=pltpu.CompilerParams(
            dimension_semantics=("parallel",),
            # TB=128 tiles clear v5e's 16 MiB default scoped-VMEM limit;
            # 32 MiB == v7x/v6e default, well under every chip's physical VMEM.
            vmem_limit_bytes=32 * 1024 * 1024),
    )(xc, wc, wf, bf)

    return out[:, :b].T                          # (B, NUM_CLASSES)


def reference_forward(x_nchw, conv_w, conv_b, fc_w, fc_b):
    """Pure-JAX f32 reference mirroring the PyTorch forward semantics (NCHW)."""
    y = jax.lax.conv_general_dilated(
        x_nchw, conv_w, window_strides=(1, 1), padding=((1, 1), (1, 1)),
        dimension_numbers=("NCHW", "OIHW", "NCHW"))
    y = jnp.maximum(y + conv_b[None, :, None, None], 0.0)
    pooled = jnp.mean(y, axis=(2, 3))            # AdaptiveAvgPool2d((1,1)) + view
    return pooled @ fc_w.T + fc_b[None, :]       # Linear


if __name__ == "__main__":
    key = jax.random.PRNGKey(0)
    k_x, k_cw, k_cb, k_fw, k_fb = jax.random.split(key, 5)

    B = 2
    x = jax.random.normal(k_x, (B, C_IN, H, W), dtype=jnp.float32)
    conv_w = 0.1 * jax.random.normal(k_cw, (C_OUT, C_IN, K, K), dtype=jnp.float32)
    conv_b = 0.1 * jax.random.normal(k_cb, (C_OUT,), dtype=jnp.float32)
    fc_w = 0.1 * jax.random.normal(k_fw, (NUM_CLASSES, C_OUT), dtype=jnp.float32)
    fc_b = 0.1 * jax.random.normal(k_fb, (NUM_CLASSES,), dtype=jnp.float32)

    # Weight layout glue hoisted out of the per-call path (done once).
    wc, wf, bf = prepare_params(conv_w, conv_b, fc_w, fc_b)

    logits = jax.block_until_ready(gradcam_forward(x, wc, wf, bf))
    ref = jax.block_until_ready(reference_forward(x, conv_w, conv_b, fc_w, fc_b))

    assert logits.shape == (B, NUM_CLASSES) and logits.dtype == jnp.float32
    # bf16 im2col / conv weights (with f32 MXU accumulation) vs. f32 reference:
    # tolerance loosened per review.
    assert jnp.allclose(logits, ref, atol=2e-2, rtol=2e-2), (logits, ref)
    print("KERNEL_OK")
</pallas_src>

<mosaic_0001>
module attributes {stable_mosaic.version = 11 : i64} {
  func.func @gradcam_fwd_kernel(%arg0: i32, %arg1: memref<37x512xbf16, #tpu.memory_space<vmem>>, %arg2: memref<8x37xbf16, #tpu.memory_space<vmem>>, %arg3: memref<10x8xf32, #tpu.memory_space<vmem>>, %arg4: memref<10x1xf32, #tpu.memory_space<vmem>>, %arg5: memref<10x2xf32, #tpu.memory_space<vmem>>) attributes {dimension_semantics = [#tpu.dimension_semantics<parallel>], iteration_bounds = array<i64: 1>, scalar_prefetch = 0 : i64, scratch_operands = 0 : i64, tpu.core_type = #tpu.core_type<tc>, window_params = [{transform_indices = @transform_0, window_bounds = array<i64: 37, 512>}, {pipeline_mode = #tpu.pipeline_mode<synchronous>, transform_indices = @transform_1, window_bounds = array<i64: 8, 37>}, {pipeline_mode = #tpu.pipeline_mode<synchronous>, transform_indices = @transform_2, window_bounds = array<i64: 10, 8>}, {pipeline_mode = #tpu.pipeline_mode<synchronous>, transform_indices = @transform_3, window_bounds = array<i64: 10, 1>}, {transform_indices = @transform_4, window_bounds = array<i64: 10, 2>}]} {
    %c0 = arith.constant 0 : index
    %c0_0 = arith.constant 0 : index
    %0 = vector.load %arg2[%c0, %c0_0] : memref<8x37xbf16, #tpu.memory_space<vmem>>, vector<8x37xbf16>
    %c0_1 = arith.constant 0 : index
    %c0_2 = arith.constant 0 : index
    %1 = vector.load %arg1[%c0_1, %c0_2] : memref<37x512xbf16, #tpu.memory_space<vmem>>, vector<37x512xbf16>
    %cst = arith.constant dense<0.000000e+00> : vector<8x512xf32>
    %2 = tpu.matmul %0, %1, %cst {dimension_numbers = #tpu.dot_dimension_numbers<[1], [0], [0], [1], [0, 0, 1, 1], [], []>} : vector<8x37xbf16>, vector<37x512xbf16>, vector<8x512xf32> -> vector<8x512xf32>
    %cst_3 = arith.constant 0.000000e+00 : f32
    %3 = vector.broadcast %cst_3 : f32 to vector<8x512xf32>
    %4 = arith.maximumf %2, %3 : vector<8x512xf32>
    %5 = tpu.iota {dimensions = array<i32: 1>} : vector<8x2xi32>
    %cst_4 = arith.constant 0.000000e+00 : f32
    %6 = vector.broadcast %cst_4 : f32 to vector<8x2xf32>
    %7 = vector.extract_strided_slice %4 {offsets = [0, 0], sizes = [8, 256], strides = [1, 1]} : vector<8x512xf32> to vector<8x256xf32>
    %cst_5 = arith.constant dense<0.000000e+00> : vector<8xf32>
    %8 = vector.multi_reduction <add>, %7, %cst_5 [1] : vector<8x256xf32> to vector<8xf32>
    %9 = vector.shape_cast %8 : vector<8xf32> to vector<8x1xf32>
    %c0_i32 = arith.constant 0 : i32
    %10 = vector.broadcast %c0_i32 : i32 to vector<8x2xi32>
    %11 = arith.cmpi eq, %5, %10 : vector<8x2xi32>
    %cst_6 = arith.constant 0.000000e+00 : f32
    %12 = vector.shape_cast %9 : vector<8x1xf32> to vector<8x1xf32>
    %13 = vector.broadcast %12 : vector<8x1xf32> to vector<8x2xf32>
    %14 = vector.broadcast %cst_6 : f32 to vector<8x2xf32>
    %15 = arith.select %11, %13, %14 : vector<8x2xi1>, vector<8x2xf32>
    %16 = arith.addf %6, %15 : vector<8x2xf32>
    %17 = vector.extract_strided_slice %4 {offsets = [0, 256], sizes = [8, 256], strides = [1, 1]} : vector<8x512xf32> to vector<8x256xf32>
    %cst_7 = arith.constant dense<0.000000e+00> : vector<8xf32>
    %18 = vector.multi_reduction <add>, %17, %cst_7 [1] : vector<8x256xf32> to vector<8xf32>
    %19 = vector.shape_cast %18 : vector<8xf32> to vector<8x1xf32>
    %c1_i32 = arith.constant 1 : i32
    %20 = vector.broadcast %c1_i32 : i32 to vector<8x2xi32>
    %21 = arith.cmpi eq, %5, %20 : vector<8x2xi32>
    %cst_8 = arith.constant 0.000000e+00 : f32
    %22 = vector.shape_cast %19 : vector<8x1xf32> to vector<8x1xf32>
    %23 = vector.broadcast %22 : vector<8x1xf32> to vector<8x2xf32>
    %24 = vector.broadcast %cst_8 : f32 to vector<8x2xf32>
    %25 = arith.select %21, %23, %24 : vector<8x2xi1>, vector<8x2xf32>
    %26 = arith.addf %16, %25 : vector<8x2xf32>
    %cst_9 = arith.constant 3.906250e-03 : f32
    %27 = vector.broadcast %cst_9 : f32 to vector<8x2xf32>
    %28 = arith.mulf %26, %27 : vector<8x2xf32>
    %c0_10 = arith.constant 0 : index
    %c0_11 = arith.constant 0 : index
    %29 = vector.load %arg3[%c0_10, %c0_11] : memref<10x8xf32, #tpu.memory_space<vmem>>, vector<10x8xf32>
    %cst_12 = arith.constant dense<0.000000e+00> : vector<10x2xf32>
    %30 = tpu.matmul %29, %28, %cst_12 {dimension_numbers = #tpu.dot_dimension_numbers<[1], [0], [0], [1], [0, 0, 1, 1], [], []>} : vector<10x8xf32>, vector<8x2xf32>, vector<10x2xf32> -> vector<10x2xf32>
    %c0_13 = arith.constant 0 : index
    %c0_14 = arith.constant 0 : index
    %31 = vector.load %arg4[%c0_13, %c0_14] : memref<10x1xf32, #tpu.memory_space<vmem>>, vector<10x1xf32>
    %32 = vector.broadcast %31 : vector<10x1xf32> to vector<10x2xf32>
    %33 = arith.addf %30, %32 : vector<10x2xf32>
    %c0_15 = arith.constant 0 : index
    %c0_16 = arith.constant 0 : index
    %34 = vector.load %arg5[%c0_15, %c0_16] : memref<10x2xf32, #tpu.memory_space<vmem>>, vector<10x2xf32>
    tpu.vector_store %arg5[%c0_15, %c0_16], %33 {strides = array<i32>} : memref<10x2xf32, #tpu.memory_space<vmem>>, vector<10x2xf32>,
    return
  }
  func.func @transform_0(%arg0: i32) -> (i32, i32) {
    %c0_i32 = arith.constant 0 : i32
    %c0_i32_0 = arith.constant 0 : i32
    return %c0_i32, %arg0 : i32, i32
  }
  func.func @transform_1(%arg0: i32) -> (i32, i32) {
    %c0_i32 = arith.constant 0 : i32
    %c0_i32_0 = arith.constant 0 : i32
    %c0_i32_1 = arith.constant 0 : i32
    return %c0_i32, %c0_i32_0 : i32, i32
  }
  func.func @transform_2(%arg0: i32) -> (i32, i32) {
    %c0_i32 = arith.constant 0 : i32
    %c0_i32_0 = arith.constant 0 : i32
    %c0_i32_1 = arith.constant 0 : i32
    return %c0_i32, %c0_i32_0 : i32, i32
  }
  func.func @transform_3(%arg0: i32) -> (i32, i32) {
    %c0_i32 = arith.constant 0 : i32
    %c0_i32_0 = arith.constant 0 : i32
    %c0_i32_1 = arith.constant 0 : i32
    return %c0_i32, %c0_i32_0 : i32, i32
  }
  func.func @transform_4(%arg0: i32) -> (i32, i32) {
    %c0_i32 = arith.constant 0 : i32
    %c0_i32_0 = arith.constant 0 : i32
    return %c0_i32, %arg0 : i32, i32
  }
}

</mosaic_0001>

<llo_original>
// kernel: gradcam_forward.1
$region0: #{gradcam_forward.1}
  #allocation0 [shape = 'u32[]', space=smem, size = 0x4, offset = 0x4, fixed_abs, tag = 'smem constant byte address 0x4 - core index']
  #allocation1 [shape = 'u32[144,128]{1,0:T(1,128)}', space=vmem, size = 0x12000, scoped, tag = 'internal scratch']
  %s0 = inlined_call_operand.vmem [shape: bf16[37,512], index: 0, kind: input, shape index: {}]
  %s1 = inlined_call_operand.vmem [shape: bf16[8,37], index: 1, kind: input, shape index: {}]
  %s2 = inlined_call_operand.vmem [shape: f32[10,8], index: 2, kind: input, shape index: {}]
  %s3 = inlined_call_operand.vmem [shape: f32[10,1], index: 3, kind: input, shape index: {}]
  %s4 = inlined_call_operand.vmem [shape: f32[10,2], index: 4, kind: output, shape index: {}]
  %s5 = sld [smem:[#allocation0]]
  $region26: #{gradcam_forward.1} parent=0
    _
  %s7 = ssub.s32 1, %s5
  %s8 = scalar_select 0, %s7, %s5
  // Predicated region
  $region2: #{gradcam_forward.1} parent=0 // pred_check
    _
  $region3: #{gradcam_forward.1} parent=0 // pred_check_branch
    %10 = sbr.rel (0) target = $region5
  $region4: #{gradcam_forward.1} parent=0 // pred_region
    _
  $region5: #{gradcam_forward.1} parent=0 // pred_fallthru
    _
  // Predicated region
  $region6: #{gradcam_forward.1} parent=0 // pred_check
    _
  $region7: #{gradcam_forward.1} parent=0 // pred_check_branch
    %12 = sbr.rel (0) target = $region9
  $region8: #{gradcam_forward.1} parent=0 // pred_region
    _
  $region9: #{gradcam_forward.1} parent=0 // pred_fallthru
    _
  // Predicated region
  $region10: #{gradcam_forward.1} parent=0 // pred_check
    _
  $region11: #{gradcam_forward.1} parent=0 // pred_check_branch
    %14 = sbr.rel (0) target = $region13
  $region12: #{gradcam_forward.1} parent=0 // pred_region
    _
  $region13: #{gradcam_forward.1} parent=0 // pred_fallthru
    _
  // Predicated region
  $region14: #{gradcam_forward.1} parent=0 // pred_check
    _
  $region15: #{gradcam_forward.1} parent=0 // pred_check_branch
    %16 = sbr.rel (0) target = $region17
  $region16: #{gradcam_forward.1} parent=0 // pred_region
    _
  $region17: #{gradcam_forward.1} parent=0 // pred_fallthru
    _
  %v18 = vld [vmem:[%s1] sm:$0xf]
  %v19 = vld [vmem:[%s0] sm:$0xff]
  %v20 = vld [vmem:[%s0 + $0x8] sm:$0xff]
  %v21 = vld [vmem:[%s0 + $0x10] sm:$0xff]
  %v22 = vld [vmem:[%s0 + $0x18] sm:$0xff]
  %v23 = vld [vmem:[%s0 + $0x20] sm:$0xff]
  %v24 = vld [vmem:[%s0 + $0x28] sm:$0xff]
  %v25 = vld [vmem:[%s0 + $0x30] sm:$0xff]
  %v26 = vld [vmem:[%s0 + $0x38] sm:$0xff]
  %v27 = vld [vmem:[%s0 + $0x40] sm:$0x77]
  %v28 = vld [vmem:[%s0 + $0x48] sm:$0x77]
  %v39 = vunpack.c.l.b16 %v19
  %v40 = vunpack.c.h.b16 %v19
  %v41 = vunpack.c.l.b16 %v20
  %v42 = vunpack.c.h.b16 %v20
  %v43 = vunpack.c.l.b16 %v21
  %v44 = vunpack.c.h.b16 %v21
  %v45 = vunpack.c.l.b16 %v22
  %v46 = vunpack.c.h.b16 %v22
  %v47 = vunpack.c.l.b16 %v23
  %v48 = vunpack.c.h.b16 %v23
  %v49 = vunpack.c.l.b16 %v24
  %v50 = vunpack.c.h.b16 %v24
  %v51 = vunpack.c.l.b16 %v25
  %v52 = vunpack.c.h.b16 %v25
  %v53 = vunpack.c.l.b16 %v26
  %v54 = vunpack.c.h.b16 %v26
  %v55 = vunpack.c.l.b16 %v27
  %v56 = vunpack.c.h.b16 %v27
  %v57 = vunpack.c.l.b16 %v28
  %v58 = vunpack.c.h.b16 %v28
  %v59 = vpack.c.b16 %v43, %v39
  %v60 = vpack.c.b16 %v44, %v40
  %v61 = vpack.c.b16 %v45, %v41
  %v62 = vpack.c.b16 %v46, %v42
  %v63 = vpack.c.b16 %v51, %v47
  %v64 = vpack.c.b16 %v52, %v48
  %v65 = vpack.c.b16 %v53, %v49
  %v66 = vpack.c.b16 %v54, %v50
  %v67 = vpack.c.b16 %v55, %v55
  %v68 = vpack.c.b16 %v56, %v56
  %v69 = vpack.c.b16 %v57, %v57
  %v70 = vpack.c.b16 %v58, %v58
  %vm79 = vcmask 302080
  %v81 = vsel %vm79, %v18, 0
  %vm83 = vcmask 1041408
  %vm84 = vcmask 1042432
  %v85 = vsel %vm83, 4294967295, 65535
  %v86 = vsel %vm84, %v85, 0
  %v88 = vand.u32 %v67, %v86
  %v91 = vand.u32 %v68, %v86
  %v94 = vand.u32 %v69, %v86
  %v97 = vand.u32 %v70, %v86
  %99 = vmatprep.subr.bf16.mxu0 %v60
  %100 = vmatpush1.bf16.msra.mxu0 %v59
  %101 = vmatprep.subr.bf16.mxu0 %v64
  %102 = vmatpush1.bf16.msra.mxu0 %v63
  %103 = vmatprep.subr.bf16.mxu0 %v91
  %104 = vmatpush1.bf16.msra.mxu0 %v88
  %105 = vmatprep.subr.bf16.mxu0 0
  %106 = vmatpush1.bf16.msra.mxu0 0
  %107 = vmatprep.subr.bf16.mxu0 0
  %108 = vmatpush1.bf16.msra.mxu0 0
  %109 = vmatprep.subr.bf16.mxu0 0
  %110 = vmatpush1.bf16.msra.mxu0 0
  %111 = vmatprep.subr.bf16.mxu0 0
  %112 = vmatpush1.bf16.msra.mxu0 0
  %113 = vmatprep.subr.bf16.mxu0 0
  %114 = vmatpush1.bf16.msra.mxu0 0
  %115 = vmatprep.subr.bf16.mxu0 0
  %116 = vmatpush1.bf16.msra.mxu0 0
  %117 = vmatprep.subr.bf16.mxu0 0
  %118 = vmatpush1.bf16.msra.mxu0 0
  %119 = vmatprep.subr.bf16.mxu0 0
  %120 = vmatpush1.bf16.msra.mxu0 0
  %121 = vmatprep.subr.bf16.mxu0 0
  %122 = vmatpush1.bf16.msra.mxu0 0
  %123 = vmatprep.subr.bf16.mxu0 0
  %124 = vmatpush1.bf16.msra.mxu0 0
  %125 = vmatprep.subr.bf16.mxu0 0
  %126 = vmatpush1.bf16.msra.mxu0 0
  %127 = vmatprep.subr.bf16.mxu0 0
  %128 = vmatpush1.bf16.msra.mxu0 0
  %129 = vmatprep.subr.bf16.mxu0 0
  %130 = vmatpush1.bf16.msra.mxu0 0
  %131 = vmatprep.mubr.bf16.mxu0 0
  %132 = vmatmul.mubr.bf16.gmra.mrb[0].mxu0 %v81
  %v133 = vpop.f32.mrb[0].mxu0
  %v134 = vadd.f32 0.0, %v133
  %v135 = vpop.f32.mrb[0].mxu0
  %v136 = vadd.f32 0.0, %v135
  %v137 = vpop.f32.mrb[0].mxu0
  %v138 = vpop.f32.mrb[0].mxu0
  %139 = vdwg.mxu0
  %140 = vmatprep.subr.bf16.mxu0 %v62
  %141 = vmatpush1.bf16.msra.mxu0 %v61
  %142 = vmatprep.subr.bf16.mxu0 %v66
  %143 = vmatpush1.bf16.msra.mxu0 %v65
  %144 = vmatprep.subr.bf16.mxu0 %v97
  %145 = vmatpush1.bf16.msra.mxu0 %v94
  %146 = vmatprep.subr.bf16.mxu0 0
  %147 = vmatpush1.bf16.msra.mxu0 0
  %148 = vmatprep.subr.bf16.mxu0 0
  %149 = vmatpush1.bf16.msra.mxu0 0
  %150 = vmatprep.subr.bf16.mxu0 0
  %151 = vmatpush1.bf16.msra.mxu0 0
  %152 = vmatprep.subr.bf16.mxu0 0
  %153 = vmatpush1.bf16.msra.mxu0 0
  %154 = vmatprep.subr.bf16.mxu0 0
  %155 = vmatpush1.bf16.msra.mxu0 0
  %156 = vmatprep.subr.bf16.mxu0 0
  %157 = vmatpush1.bf16.msra.mxu0 0
  %158 = vmatprep.subr.bf16.mxu0 0
  %159 = vmatpush1.bf16.msra.mxu0 0
  %160 = vmatprep.subr.bf16.mxu0 0
  %161 = vmatpush1.bf16.msra.mxu0 0
  %162 = vmatprep.subr.bf16.mxu0 0
  %163 = vmatpush1.bf16.msra.mxu0 0
  %164 = vmatprep.subr.bf16.mxu0 0
  %165 = vmatpush1.bf16.msra.mxu0 0
  %166 = vmatprep.subr.bf16.mxu0 0
  %167 = vmatpush1.bf16.msra.mxu0 0
  %168 = vmatprep.subr.bf16.mxu0 0
  %169 = vmatpush1.bf16.msra.mxu0 0
  %170 = vmatprep.subr.bf16.mxu0 0
  %171 = vmatpush1.bf16.msra.mxu0 0
  %172 = vmatprep.mubr.bf16.mxu0 0
  %173 = vmatmul.mubr.bf16.gmra.mrb[0].mxu0 %v81
  %v174 = vpop.f32.mrb[0].mxu0
  %v175 = vadd.f32 0.0, %v174
  %v176 = vpop.f32.mrb[0].mxu0
  %v177 = vadd.f32 0.0, %v176
  %v178 = vpop.f32.mrb[0].mxu0
  %v179 = vpop.f32.mrb[0].mxu0
  %180 = vdwg.mxu0
  %v181 = vmax.f32 %v134, 0.0
  %v182 = vmax.f32 %v136, 0.0
  %v183 = vmax.f32 %v175, 0.0
  %v184 = vmax.f32 %v177, 0.0
  %v185 = vlaneseq
  %v186 = vand.u32 %v185, 127
  %v187 = vadd.f32 %v181, %v182
  %188 = vadd.xlane.f32.xlu0 %v187
  %v189 = vpop.xlane.xlu0 %188
  %vm190 = vcmp.eq.s32.totalorder %v186, 0
  %v191 = vsel %vm190, %v189, 0.0
  %v192 = vadd.f32 %v191, 0.0
  %v193 = vadd.f32 %v183, %v184
  %194 = vadd.xlane.f32.xlu0 %v193
  %v195 = vpop.xlane.xlu0 %194
  %vm196 = vcmp.eq.s32.totalorder %v186, 1
  %v197 = vsel %vm196, %v195, 0.0
  %v198 = vadd.f32 %v192, %v197
  %v199 = vmul.f32 %v198, 0.00390625
  %v200 = vld [vmem:[%s2] sm:$0xff]
  %v201 = vld [vmem:[%s2 + $0x8] sm:$0x3]
  %v202 = vld [vmem:[%s3] sm:$0xff]
  %v203 = vld [vmem:[%s3 + $0x8] sm:$0x3]
  %205 = vset.pattern.permute.xlu0 0
  %206 = vperm.xlu0 %205, %v202
  %v207 = vpop.permute.xlu0 %206
  %210 = vset.pattern.permute.xlu0 0
  %211 = vperm.xlu0 %210, %v203
  %v212 = vpop.permute.xlu0 %211
  %vm214 = vcmask 64512
  %v216 = vsel %vm214, %v200, 0
  %v219 = vsel %vm214, %v201, 0
  %221 = vmatprep.subr.mxu0 0.0
  %222 = vmatpush1.msra.mxu0 %v199
  %223 = vmatprep.subr.mxu0 0.0
  %224 = vmatpush1.msra.mxu0 0.0
  %225 = vmatprep.subr.mxu0 0.0
  %226 = vmatpush1.msra.mxu0 0.0
  %227 = vmatprep.subr.mxu0 0.0
  %228 = vmatpush1.msra.mxu0 0.0
  %229 = vmatprep.subr.mxu0 0.0
  %230 = vmatpush1.msra.mxu0 0.0
  %231 = vmatprep.subr.mxu0 0.0
  %232 = vmatpush1.msra.mxu0 0.0
  %233 = vmatprep.subr.mxu0 0.0
  %234 = vmatpush1.msra.mxu0 0.0
  %235 = vmatprep.subr.mxu0 0.0
  %236 = vmatpush1.msra.mxu0 0.0
  %237 = vmatprep.subr.mxu0 0.0
  %238 = vmatpush1.msra.mxu0 0.0
  %239 = vmatprep.subr.mxu0 0.0
  %240 = vmatpush1.msra.mxu0 0.0
  %241 = vmatprep.subr.mxu0 0.0
  %242 = vmatpush1.msra.mxu0 0.0
  %243 = vmatprep.subr.mxu0 0.0
  %244 = vmatpush1.msra.mxu0 0.0
  %245 = vmatprep.subr.mxu0 0.0
  %246 = vmatpush1.msra.mxu0 0.0
  %247 = vmatprep.subr.mxu0 0.0
  %248 = vmatpush1.msra.mxu0 0.0
  %249 = vmatprep.subr.mxu0 0.0
  %250 = vmatpush1.msra.mxu0 0.0
  %251 = vmatprep.subr.mxu0 0.0
  %252 = vmatpush1.msra.mxu0 0.0
  %253 = vmatprep.subr.mxu0 0.0
  %254 = vmatpush1.msra.mxu0 0.0
  %255 = vmatprep.subr.mxu0 0.0
  %256 = vmatpush1.msra.mxu0 0.0
  %257 = vmatprep.subr.mxu0 0.0
  %258 = vmatpush1.msra.mxu0 0.0
  %259 = vmatprep.subr.mxu0 0.0
  %260 = vmatpush1.msra.mxu0 0.0
  %261 = vmatprep.subr.mxu0 0.0
  %262 = vmatpush1.msra.mxu0 0.0
  %263 = vmatprep.subr.mxu0 0.0
  %264 = vmatpush1.msra.mxu0 0.0
  %265 = vmatprep.subr.mxu0 0.0
  %266 = vmatpush1.msra.mxu0 0.0
  %267 = vmatprep.subr.mxu0 0.0
  %268 = vmatpush1.msra.mxu0 0.0
  %269 = vmatprep.subr.mxu0 0.0
  %270 = vmatpush1.msra.mxu0 0.0
  %271 = vmatprep.subr.mxu0 0.0
  %272 = vmatpush1.msra.mxu0 0.0
  %273 = vmatprep.subr.mxu0 0.0
  %274 = vmatpush1.msra.mxu0 0.0
  %275 = vmatprep.subr.mxu0 0.0
  %276 = vmatpush1.msra.mxu0 0.0
  %277 = vmatprep.subr.mxu0 0.0
  %278 = vmatpush1.msra.mxu0 0.0
  %279 = vmatprep.subr.mxu0 0.0
  %280 = vmatpush1.msra.mxu0 0.0
  %281 = vmatprep.subr.mxu0 0.0
  %282 = vmatpush1.msra.mxu0 0.0
  %283 = vmatprep.subr.mxu0 0.0
  %284 = vmatpush1.msra.mxu0 0.0
  %285 = vmatprep.mubr.f32.mxu0 0.0
  %286 = vmatmul.mubr.f32.gmra.mrb[0].mxu0 %v216
  %v287 = vpop.f32.mrb[0].mxu0
  %v288 = vadd.f32 %v207, %v287
  %v289 = vpop.f32.mrb[0].mxu0
  %290 = vmatprep.mubr.f32.mxu0 0.0
  %291 = vmatmul.mubr.f32.gmra.mrb[0].mxu0 %v219
  %v292 = vpop.f32.mrb[0].mxu0
  %v293 = vadd.f32 %v212, %v292
  %v294 = vpop.f32.mrb[0].mxu0
  %295 = vdwg.mxu0
  %vm296 = vcmask 15360
  %297 = vst.msk [vmem:[%s4] sm:$0xff] %vm296, %v288
  %vm298 = vcmask 9216
  %299 = vst.msk [vmem:[%s4 + $0x8] sm:$0x3] %vm298, %v293
  // Predicated region
  $region18: #{gradcam_forward.1} parent=0 // pred_check
    _
  $region19: #{gradcam_forward.1} parent=0 // pred_check_branch
    %301 = sbr.rel (0) target = $region21
  $region20: #{gradcam_forward.1} parent=0 // pred_region
    _
  $region21: #{gradcam_forward.1} parent=0 // pred_fallthru
    _
  // Predicated region
  $region22: #{gradcam_forward.1} parent=0 // pred_check
    _
  $region23: #{gradcam_forward.1} parent=0 // pred_check_branch
    %303 = sbr.rel (0) target = $region25
  $region24: #{gradcam_forward.1} parent=0 // pred_region
    _
  $region25: #{gradcam_forward.1} parent=0 // pred_fallthru
    _

</llo_original>
